<compile_context>
chip_gen: v6e
topology: v6e:2x2x1
jax: 0.10.0
libtpu: 0.0.40
codegen_flags: <defaults>
</compile_context>

<pallas_src>
import jax
import jax.numpy as jnp
from jax.experimental import pallas as pl
from jax.experimental.pallas import tpu as pltpu

GAMMA = 2.0                 # module default
EPS = 1e-07                 # module default
LANES = 128
MAX_TILE_ROWS = 4096        # 4096 * 128 * 4 B = 2 MiB per f32 input block/step
X_PAD_SENTINEL = -1.0e4     # exp(-|sentinel|) underflows to 0 -> padded g == 0
VMEM_LIMIT_BYTES = 32 * 1024 * 1024


def _make_fused_kernel(tr, has_sw):
    """Fused elementwise + reduction kernel (static config baked in)."""
    c = LANES

    def kernel(*refs):
        if has_sw:
            x_ref, t_ref, sw_ref, tacc_ref, aacc_ref, gacc_ref = refs
        else:
            x_ref, t_ref, tacc_ref, aacc_ref, gacc_ref = refs
            sw_ref = None

        @pl.when(pl.program_id(1) == 0)
        def _():
            tacc_ref[...] = jnp.zeros_like(tacc_ref)
            aacc_ref[...] = jnp.zeros_like(aacc_ref)
            gacc_ref[...] = jnp.zeros_like(gacc_ref)

        x = x_ref[...].astype(jnp.float32)
        t = t_ref[...].astype(jnp.float32)

        # One exp feeds both sigmoid and the stable BCE-with-logits.
        e = jnp.exp(-jnp.abs(x))
        denom = 1.0 + e
        # Approx reciprocal (EUP slot) + one Newton step (VPU) instead of a
        # full-precision divide.
        r0 = pl.reciprocal(denom, approx=True)
        inv = r0 * (2.0 - denom * r0)
        p = jnp.where(x >= 0.0, inv, e * inv)                 # sigmoid(x)
        ce = jnp.maximum(x, 0.0) - x * t + jnp.log(denom)     # BCE w/ logits
        p_t = p * t + (1.0 - p) * (1.0 - t)
        w = 1.0 - p_t + EPS
        g = (w * w) * ce                                      # gamma == 2.0
        if has_sw:
            g = g * sw_ref[...].astype(jnp.float32)

        # Fold (tr, c) -> (8, c) with plain vreg adds; the cross-lane reduce is
        # done once in the wrapper instead of every grid step.
        tacc_ref[...] += t.reshape(tr // 8, 8, c).sum(axis=0)
        aacc_ref[...] += (t * g).reshape(tr // 8, 8, c).sum(axis=0)
        gacc_ref[...] += g.reshape(tr // 8, 8, c).sum(axis=0)

    return kernel


def focal_loss_improved(inputs, targets, sample_weights=None):
    """Equivalent of FocalLossImproved()(inputs, targets, sample_weights)."""
    # TODO(synk): only the default config (alpha=None, auto_weight=True,
    # gamma=2.0, reduction='mean') is implemented.

    def _prep(a):
        a = jnp.asarray(a)
        if a.dtype != jnp.bfloat16:   # keep bf16 in HBM, upcast inside kernel
            a = a.astype(jnp.float32)
        return a.reshape(-1)

    x = _prep(inputs)
    t = _prep(targets)
    has_sw = sample_weights is not None
    sw = _prep(sample_weights) if has_sw else None

    n = x.shape[0]
    c = LANES

    streams = [x, t] + ([sw] if has_sw else [])
    row_mult = 16 if any(a.dtype == jnp.bfloat16 for a in streams) else 8

    r_raw = -(-n // c)                        # rows needed at 128 lanes
    r_aligned = -(-r_raw // row_mult) * row_mult
    tr = min(MAX_TILE_ROWS, r_aligned)        # row tile (multiple of row_mult)
    num_blocks = -(-r_aligned // tr)
    r = num_blocks * tr
    total = r * c

    nc = 2 if (num_blocks % 2 == 0 and num_blocks >= 2) else 1
    steps = num_blocks // nc

    def _layout(a, fill):
        # Aligned fast path: no pad / no copy, just a metadata reshape.
        if a.shape[0] != total:
            a = jnp.pad(a, (0, total - a.shape[0]), constant_values=fill)
        return a.reshape(r, c)

    operands = [_layout(x, X_PAD_SENTINEL), _layout(t, 0.0)]
    if has_sw:
        operands.append(_layout(sw, 0.0))

    in_spec = pl.BlockSpec((tr, c), lambda cc, i: (cc * steps + i, 0))
    acc_spec = pl.BlockSpec((8, c), lambda cc, i: (cc, 0))
    acc_shape = jax.ShapeDtypeStruct((nc * 8, c), jnp.float32)

    t_part, a_part, g_part = pl.pallas_call(
        _make_fused_kernel(tr, has_sw),
        out_shape=(acc_shape, acc_shape, acc_shape),
        grid=(nc, steps),
        in_specs=[in_spec] * len(operands),
        out_specs=(acc_spec, acc_spec, acc_spec),
        compiler_params=pltpu.CompilerParams(
            dimension_semantics=("parallel", "arbitrary"),
            vmem_limit_bytes=VMEM_LIMIT_BYTES),
    )(*operands)

    nf = jnp.float32(n)
    s_t = jnp.sum(t_part)
    s_a = jnp.sum(a_part)
    s_g = jnp.sum(g_part)
    pos_ratio = s_t / nf
    # sum(alpha_t * g) = S_A + pr * (S_g - 2*S_A) = (1-2pr)*S_A + pr*S_g
    loss_sum = (1.0 - 2.0 * pos_ratio) * s_a + pos_ratio * s_g
    return (loss_sum / nf).astype(jnp.float32)   # reduction='mean'


def _reference_focal(inputs, targets, sample_weights=None):
    x = jnp.asarray(inputs, jnp.float32)
    t = jnp.asarray(targets, jnp.float32)
    p = jax.nn.sigmoid(x)
    ce = jnp.maximum(x, 0.0) - x * t + jnp.log(1.0 + jnp.exp(-jnp.abs(x)))
    p_t = p * t + (1.0 - p) * (1.0 - t)
    pr = jnp.mean(t)
    alpha_t = (1.0 - pr) * t + pr * (1.0 - t)
    fl = alpha_t * jnp.power(1.0 - p_t + EPS, GAMMA) * ce
    if sample_weights is not None:
        fl = fl * jnp.asarray(sample_weights, jnp.float32)
    return jnp.mean(fl)


if __name__ == "__main__":
    key = jax.random.PRNGKey(0)
    k1, k2, k3, k4, k5 = jax.random.split(key, 5)

    # Case 1: exact (8,128) multiple, no sample weights (aligned no-copy path).
    x1 = jax.random.normal(k1, (16, 128), dtype=jnp.float32) * 2.0
    t1 = jax.random.bernoulli(k2, p=0.3, shape=(16, 128)).astype(jnp.float32)
    out1 = jax.block_until_ready(focal_loss_improved(x1, t1))
    ref1 = jax.block_until_ready(_reference_focal(x1, t1))
    assert jnp.allclose(out1, ref1, rtol=1e-5, atol=1e-6), (out1, ref1)

    # Case 2: ragged shape -> sentinel-padded path, with sample weights.
    x2 = jax.random.normal(k3, (7, 300), dtype=jnp.float32)
    t2 = jax.random.bernoulli(k4, p=0.25, shape=(7, 300)).astype(jnp.float32)
    sw2 = jax.random.uniform(k5, (7, 300), dtype=jnp.float32) + 0.5
    out2 = jax.block_until_ready(focal_loss_improved(x2, t2, sw2))
    ref2 = jax.block_until_ready(_reference_focal(x2, t2, sw2))
    assert jnp.allclose(out2, ref2, rtol=1e-5, atol=1e-6), (out2, ref2)

    # Case 3: larger aligned case exercising multi-vreg tiles.
    xb = jax.random.normal(k1, (64, 512), dtype=jnp.float32)
    tb = jax.random.bernoulli(k2, p=0.4, shape=(64, 512)).astype(jnp.float32)
    outb = jax.block_until_ready(focal_loss_improved(xb, tb))
    refb = jax.block_until_ready(_reference_focal(xb, tb))
    assert jnp.allclose(outb, refb, rtol=2e-5, atol=1e-6), (outb, refb)

    # Case 4: bf16 logits, ragged -> 16-row-aligned bf16 block path.
    xc = (jax.random.normal(k3, (7, 130)) * 2.0).astype(jnp.bfloat16)
    tc = jax.random.bernoulli(k4, p=0.35, shape=(7, 130)).astype(jnp.float32)
    outc = jax.block_until_ready(focal_loss_improved(xc, tc))
    refc = jax.block_until_ready(_reference_focal(xc.astype(jnp.float32), tc))
    assert jnp.allclose(outc, refc, rtol=2e-5, atol=1e-6), (outc, refc)

    print("KERNEL_OK")
</pallas_src>

<mosaic_0001>
module attributes {stable_mosaic.version = 11 : i64} {
  func.func @kernel(%arg0: i32, %arg1: i32, %arg2: memref<16x128xf32, #tpu.memory_space<vmem>>, %arg3: memref<16x128xf32, #tpu.memory_space<vmem>>, %arg4: memref<8x128xf32, #tpu.memory_space<vmem>>, %arg5: memref<8x128xf32, #tpu.memory_space<vmem>>, %arg6: memref<8x128xf32, #tpu.memory_space<vmem>>) attributes {dimension_semantics = [#tpu.dimension_semantics<parallel>, #tpu.dimension_semantics<arbitrary>], iteration_bounds = array<i64: 1, 1>, scalar_prefetch = 0 : i64, scratch_operands = 0 : i64, tpu.core_type = #tpu.core_type<tc>, window_params = [{transform_indices = @transform_0, window_bounds = array<i64: 16, 128>}, {transform_indices = @transform_1, window_bounds = array<i64: 16, 128>}, {transform_indices = @transform_2, window_bounds = array<i64: 8, 128>}, {transform_indices = @transform_3, window_bounds = array<i64: 8, 128>}, {transform_indices = @transform_4, window_bounds = array<i64: 8, 128>}]} {
    %c0_i32 = arith.constant 0 : i32
    %0 = arith.cmpi eq, %arg1, %c0_i32 : i32
    %1 = arith.extui %0 : i1 to i32
    %c0_i32_0 = arith.constant 0 : i32
    %2 = arith.cmpi ne, %1, %c0_i32_0 : i32
    scf.if %2 {
      %cst_27 = arith.constant 0.000000e+00 : f32
      %55 = vector.broadcast %cst_27 : f32 to vector<8x128xf32>
      %c0_28 = arith.constant 0 : index
      %c0_29 = arith.constant 0 : index
      %56 = vector.load %arg4[%c0_28, %c0_29] : memref<8x128xf32, #tpu.memory_space<vmem>>, vector<8x128xf32>
      tpu.vector_store %arg4[%c0_28, %c0_29], %55 {strides = array<i32>} : memref<8x128xf32, #tpu.memory_space<vmem>>, vector<8x128xf32>,
      %cst_30 = arith.constant 0.000000e+00 : f32
      %57 = vector.broadcast %cst_30 : f32 to vector<8x128xf32>
      %c0_31 = arith.constant 0 : index
      %c0_32 = arith.constant 0 : index
      %58 = vector.load %arg5[%c0_31, %c0_32] : memref<8x128xf32, #tpu.memory_space<vmem>>, vector<8x128xf32>
      tpu.vector_store %arg5[%c0_31, %c0_32], %57 {strides = array<i32>} : memref<8x128xf32, #tpu.memory_space<vmem>>, vector<8x128xf32>,
      %cst_33 = arith.constant 0.000000e+00 : f32
      %59 = vector.broadcast %cst_33 : f32 to vector<8x128xf32>
      %c0_34 = arith.constant 0 : index
      %c0_35 = arith.constant 0 : index
      %60 = vector.load %arg6[%c0_34, %c0_35] : memref<8x128xf32, #tpu.memory_space<vmem>>, vector<8x128xf32>
      tpu.vector_store %arg6[%c0_34, %c0_35], %59 {strides = array<i32>} : memref<8x128xf32, #tpu.memory_space<vmem>>, vector<8x128xf32>,
    } else {
    }
    %c0 = arith.constant 0 : index
    %c0_1 = arith.constant 0 : index
    %3 = vector.load %arg2[%c0, %c0_1] : memref<16x128xf32, #tpu.memory_space<vmem>>, vector<16x128xf32>
    %c0_2 = arith.constant 0 : index
    %c0_3 = arith.constant 0 : index
    %4 = vector.load %arg3[%c0_2, %c0_3] : memref<16x128xf32, #tpu.memory_space<vmem>>, vector<16x128xf32>
    %5 = math.absf %3 : vector<16x128xf32>
    %cst = arith.constant 0.000000e+00 : f32
    %6 = vector.broadcast %cst : f32 to vector<16x128xf32>
    %7 = arith.subf %6, %5 : vector<16x128xf32>
    %8 = math.exp %7 : vector<16x128xf32>
    %cst_4 = arith.constant 1.000000e+00 : f32
    %9 = vector.broadcast %cst_4 : f32 to vector<16x128xf32>
    %10 = arith.addf %9, %8 : vector<16x128xf32>
    %11 = tpu.reciprocal %10 {approx = true} : vector<16x128xf32> -> vector<16x128xf32>
    %12 = arith.mulf %10, %11 : vector<16x128xf32>
    %cst_5 = arith.constant 2.000000e+00 : f32
    %13 = vector.broadcast %cst_5 : f32 to vector<16x128xf32>
    %14 = arith.subf %13, %12 : vector<16x128xf32>
    %15 = arith.mulf %11, %14 : vector<16x128xf32>
    %cst_6 = arith.constant 0.000000e+00 : f32
    %16 = vector.broadcast %cst_6 : f32 to vector<16x128xf32>
    %17 = arith.cmpf oge, %3, %16 : vector<16x128xf32>
    %18 = arith.mulf %8, %15 : vector<16x128xf32>
    %19 = arith.select %17, %15, %18 : vector<16x128xi1>, vector<16x128xf32>
    %cst_7 = arith.constant 0.000000e+00 : f32
    %20 = vector.broadcast %cst_7 : f32 to vector<16x128xf32>
    %21 = arith.maximumf %3, %20 : vector<16x128xf32>
    %22 = arith.mulf %3, %4 : vector<16x128xf32>
    %23 = arith.subf %21, %22 : vector<16x128xf32>
    %24 = math.log %10 : vector<16x128xf32>
    %25 = arith.addf %23, %24 : vector<16x128xf32>
    %26 = arith.mulf %19, %4 : vector<16x128xf32>
    %cst_8 = arith.constant 1.000000e+00 : f32
    %27 = vector.broadcast %cst_8 : f32 to vector<16x128xf32>
    %28 = arith.subf %27, %19 : vector<16x128xf32>
    %cst_9 = arith.constant 1.000000e+00 : f32
    %29 = vector.broadcast %cst_9 : f32 to vector<16x128xf32>
    %30 = arith.subf %29, %4 : vector<16x128xf32>
    %31 = arith.mulf %28, %30 : vector<16x128xf32>
    %32 = arith.addf %26, %31 : vector<16x128xf32>
    %cst_10 = arith.constant 1.000000e+00 : f32
    %33 = vector.broadcast %cst_10 : f32 to vector<16x128xf32>
    %34 = arith.subf %33, %32 : vector<16x128xf32>
    %cst_11 = arith.constant 1.000000e-07 : f32
    %35 = vector.broadcast %cst_11 : f32 to vector<16x128xf32>
    %36 = arith.addf %34, %35 : vector<16x128xf32>
    %37 = arith.mulf %36, %36 : vector<16x128xf32>
    %38 = arith.mulf %37, %25 : vector<16x128xf32>
    %c0_12 = arith.constant 0 : index
    %c0_13 = arith.constant 0 : index
    %39 = vector.load %arg4[%c0_12, %c0_13] : memref<8x128xf32, #tpu.memory_space<vmem>>, vector<8x128xf32>
    %40 = vector.shape_cast %4 : vector<16x128xf32> to vector<2x8x128xf32>
    %cst_14 = arith.constant dense<0.000000e+00> : vector<8x128xf32>
    %41 = vector.multi_reduction <add>, %40, %cst_14 [0] : vector<2x8x128xf32> to vector<8x128xf32>
    %42 = arith.addf %39, %41 : vector<8x128xf32>
    %c0_15 = arith.constant 0 : index
    %c0_16 = arith.constant 0 : index
    %43 = vector.load %arg4[%c0_15, %c0_16] : memref<8x128xf32, #tpu.memory_space<vmem>>, vector<8x128xf32>
    tpu.vector_store %arg4[%c0_15, %c0_16], %42 {strides = array<i32>} : memref<8x128xf32, #tpu.memory_space<vmem>>, vector<8x128xf32>,
    %c0_17 = arith.constant 0 : index
    %c0_18 = arith.constant 0 : index
    %44 = vector.load %arg5[%c0_17, %c0_18] : memref<8x128xf32, #tpu.memory_space<vmem>>, vector<8x128xf32>
    %45 = arith.mulf %4, %38 : vector<16x128xf32>
    %46 = vector.shape_cast %45 : vector<16x128xf32> to vector<2x8x128xf32>
    %cst_19 = arith.constant dense<0.000000e+00> : vector<8x128xf32>
    %47 = vector.multi_reduction <add>, %46, %cst_19 [0] : vector<2x8x128xf32> to vector<8x128xf32>
    %48 = arith.addf %44, %47 : vector<8x128xf32>
    %c0_20 = arith.constant 0 : index
    %c0_21 = arith.constant 0 : index
    %49 = vector.load %arg5[%c0_20, %c0_21] : memref<8x128xf32, #tpu.memory_space<vmem>>, vector<8x128xf32>
    tpu.vector_store %arg5[%c0_20, %c0_21], %48 {strides = array<i32>} : memref<8x128xf32, #tpu.memory_space<vmem>>, vector<8x128xf32>,
    %c0_22 = arith.constant 0 : index
    %c0_23 = arith.constant 0 : index
    %50 = vector.load %arg6[%c0_22, %c0_23] : memref<8x128xf32, #tpu.memory_space<vmem>>, vector<8x128xf32>
    %51 = vector.shape_cast %38 : vector<16x128xf32> to vector<2x8x128xf32>
    %cst_24 = arith.constant dense<0.000000e+00> : vector<8x128xf32>
    %52 = vector.multi_reduction <add>, %51, %cst_24 [0] : vector<2x8x128xf32> to vector<8x128xf32>
    %53 = arith.addf %50, %52 : vector<8x128xf32>
    %c0_25 = arith.constant 0 : index
    %c0_26 = arith.constant 0 : index
    %54 = vector.load %arg6[%c0_25, %c0_26] : memref<8x128xf32, #tpu.memory_space<vmem>>, vector<8x128xf32>
    tpu.vector_store %arg6[%c0_25, %c0_26], %53 {strides = array<i32>} : memref<8x128xf32, #tpu.memory_space<vmem>>, vector<8x128xf32>,
    return
  }
  func.func @transform_0(%arg0: i32, %arg1: i32) -> (i32, i32) {
    %c1_i32 = arith.constant 1 : i32
    %0 = arith.muli %arg0, %c1_i32 : i32
    %1 = arith.addi %0, %arg1 : i32
    %c0_i32 = arith.constant 0 : i32
    %c0_i32_0 = arith.constant 0 : i32
    return %1, %c0_i32 : i32, i32
  }
  func.func @transform_1(%arg0: i32, %arg1: i32) -> (i32, i32) {
    %c1_i32 = arith.constant 1 : i32
    %0 = arith.muli %arg0, %c1_i32 : i32
    %1 = arith.addi %0, %arg1 : i32
    %c0_i32 = arith.constant 0 : i32
    %c0_i32_0 = arith.constant 0 : i32
    return %1, %c0_i32 : i32, i32
  }
  func.func @transform_2(%arg0: i32, %arg1: i32) -> (i32, i32) {
    %c0_i32 = arith.constant 0 : i32
    %c0_i32_0 = arith.constant 0 : i32
    return %arg0, %c0_i32 : i32, i32
  }
  func.func @transform_3(%arg0: i32, %arg1: i32) -> (i32, i32) {
    %c0_i32 = arith.constant 0 : i32
    %c0_i32_0 = arith.constant 0 : i32
    return %arg0, %c0_i32 : i32, i32
  }
  func.func @transform_4(%arg0: i32, %arg1: i32) -> (i32, i32) {
    %c0_i32 = arith.constant 0 : i32
    %c0_i32_0 = arith.constant 0 : i32
    return %arg0, %c0_i32 : i32, i32
  }
}

</mosaic_0001>

<llo_original>
// kernel: tpu_custom_call.1
$region0: #{tpu_custom_call.1}
  #allocation0 [shape = 'u32[]', space=smem, size = 0x4, offset = 0x4, fixed_abs, tag = 'smem constant byte address 0x4 - core index']
  #allocation1 [shape = 'u32[144,128]{1,0:T(1,128)}', space=vmem, size = 0x12000, scoped, tag = 'internal scratch']
  %s0 = inlined_call_operand.hbm [shape: f32[16,128], index: 0, kind: input, shape index: {}]
  %s1 = inlined_call_operand.hbm [shape: f32[16,128], index: 1, kind: input, shape index: {}]
  %s2 = inlined_call_operand.hbm [shape: f32[8,128], index: 2, kind: output, shape index: {0}]
  %s3 = inlined_call_operand.hbm [shape: f32[8,128], index: 3, kind: output, shape index: {1}]
  %s4 = inlined_call_operand.hbm [shape: f32[8,128], index: 4, kind: output, shape index: {2}]
  %5 = xla_tuple %s2, %s3, %s4
  %s6 = sld [smem:[#allocation0]]
  $region46: #{tpu_custom_call.1} parent=0
    _
  %s8 = ssub.s32 1, %s6
  %s9 = scalar_select 0, %s8, %s6
  $region1: #{tpu_custom_call.1} parent=0
    #allocation2 [shape = 'u8[8192]{0}', space=vmem, size = 0x2000, scoped, tag = 'input window, operand 0, single buffered']
    #allocation3 [shape = 's32[1]{0}', space=sflag, size = 0x4, scoped, tag = 'scoped memory for tpu_custom_call.1']
    #allocation4 [shape = 's32[1]{0}', space=sflag, size = 0x4, scoped, tag = 'scoped memory for tpu_custom_call.1']
    #allocation5 [shape = 'u8[8192]{0}', space=vmem, size = 0x2000, scoped, tag = 'input window, operand 1, single buffered']
    #allocation6 [shape = 's32[1]{0}', space=sflag, size = 0x4, scoped, tag = 'scoped memory for tpu_custom_call.1']
    #allocation7 [shape = 'u8[4096]{0}', space=vmem, size = 0x1000, scoped, tag = 'output window, operand 0, single buffered']
    #allocation8 [shape = 'u8[4096]{0}', space=vmem, size = 0x1000, scoped, tag = 'output window, operand 1, single buffered']
    #allocation9 [shape = 's32[1]{0}', space=sflag, size = 0x4, scoped, tag = 'scoped memory for tpu_custom_call.1']
    #allocation10 [shape = 'u8[4096]{0}', space=vmem, size = 0x1000, scoped, tag = 'output window, operand 2, single buffered']
    %10 = vsyncpa [#allocation3], 0
    %11 = vsyncpa [#allocation6], 0
    %12 = vsyncpa [#allocation4], 0
    %13 = vsyncpa [#allocation9], 0
    // Predicated region
    $region2: #{tpu_custom_call.1} parent=1 // pred_check
      _
    $region3: #{tpu_custom_call.1} parent=1 // pred_check_branch
      %15 = sbr.rel (0) target = $region5
    $region4: #{tpu_custom_call.1} parent=1 // pred_region
      %s16 = sadd.s32 0, 0
      %s17 = smul.u32 2, %s16
      %s19 = ssub.s32 256, 256
      %20 = vsyncadd [#allocation3], %s19
      %s21 = smul.addr %s17, 128
      %s22 = scalar_lea.hbm %s0, %s21
      %s23 = sshll.u32 [#allocation2], 4
      %s24 = int_to_ptr.vmem [resolvable:$true] %s23
      %29 = dma.hbm_to_vmem [thread:$0]  %s22, 256, %s24, [#allocation3], 128, 128, 8
    $region5: #{tpu_custom_call.1} parent=1 // pred_fallthru
      _
    // Predicated region
    $region6: #{tpu_custom_call.1} parent=1 // pred_check
      _
    $region7: #{tpu_custom_call.1} parent=1 // pred_check_branch
      %31 = sbr.rel (0) target = $region9
    $region8: #{tpu_custom_call.1} parent=1 // pred_region
      %s32 = sadd.s32 0, 0
      %s33 = smul.u32 2, %s32
      %s35 = ssub.s32 256, 256
      %36 = vsyncadd [#allocation6], %s35
      %s37 = smul.addr %s33, 128
      %s38 = scalar_lea.hbm %s1, %s37
      %s39 = sshll.u32 [#allocation5], 4
      %s40 = int_to_ptr.vmem [resolvable:$true] %s39
      %45 = dma.hbm_to_vmem [thread:$0]  %s38, 256, %s40, [#allocation6], 128, 128, 8
    $region9: #{tpu_custom_call.1} parent=1 // pred_fallthru
      _
    // Predicated region
    $region10: #{tpu_custom_call.1} parent=1 // pred_check
      _
    $region11: #{tpu_custom_call.1} parent=1 // pred_check_branch
      %47 = sbr.rel (0) target = $region13
    $region12: #{tpu_custom_call.1} parent=1 // pred_region
      %48 = dma.done [#allocation3], 256
    $region13: #{tpu_custom_call.1} parent=1 // pred_fallthru
      _
    // Predicated region
    $region14: #{tpu_custom_call.1} parent=1 // pred_check
      _
    $region15: #{tpu_custom_call.1} parent=1 // pred_check_branch
      %50 = sbr.rel (0) target = $region17
    $region16: #{tpu_custom_call.1} parent=1 // pred_region
      %51 = dma.done [#allocation6], 256
    $region17: #{tpu_custom_call.1} parent=1 // pred_fallthru
      _
    %s52 = sadd.s32 0, 0
    %s53 = smul.u32 2, %s52
    %s54 = sadd.s32 0, 0
    %s55 = smul.u32 2, %s54
    %p56 = scmp.eq.s32.totalorder 0, 0
    // Predicated region
    $region18: #{tpu_custom_call.1} parent=1 // pred_check
      %p57 = pneg %p56
    $region19: #{tpu_custom_call.1} parent=1 // pred_check_branch
      %59 = sbr.rel (%p57) target = $region21
    $region20: #{tpu_custom_call.1} parent=1 // pred_region
      %60 = vst [vmem:[#allocation7] sm:$0xff] 0.0
      %61 = vst [vmem:[#allocation8] sm:$0xff] 0.0
      %62 = vst [vmem:[#allocation10] sm:$0xff] 0.0
    $region21: #{tpu_custom_call.1} parent=1 // pred_fallthru
      _
    %v63 = vld [vmem:[#allocation2] sm:$0xff]
    %v64 = vld [vmem:[#allocation2 + $0x8] sm:$0xff]
    %v65 = vld [vmem:[#allocation5] sm:$0xff]
    %v66 = vld [vmem:[#allocation5 + $0x8] sm:$0xff]
    %v67 = vand.u32 2147483647, %v63
    %v68 = vand.u32 2147483647, %v64
    %v69 = vsub.f32 0.0, %v67
    %v70 = vsub.f32 0.0, %v68
    %v71 = vmul.f32 %v69, 1.442695
    %v72 = vpow.pop %v71
    %v73 = vmul.f32 %v70, 1.442695
    %v74 = vpow.pop %v73
    %v75 = vadd.f32 %v72, 1.0
    %v76 = vadd.f32 %v74, 1.0
    %v77 = vrcp.pop %v75
    %v78 = vrcp.pop %v76
    %v79 = vmul.f32 %v75, %v77
    %v80 = vmul.f32 %v76, %v78
    %v81 = vsub.f32 2.0, %v79
    %v82 = vsub.f32 2.0, %v80
    %v83 = vmul.f32 %v77, %v81
    %v84 = vmul.f32 %v78, %v82
    %vm85 = vcmp.ge.f32.partialorder %v63, 0.0
    %vm86 = vcmp.ge.f32.partialorder %v64, 0.0
    %v87 = vmul.f32 %v72, %v83
    %v88 = vmul.f32 %v74, %v84
    %v89 = vsel %vm85, %v83, %v87
    %v90 = vsel %vm86, %v84, %v88
    %v91 = vmax.f32 %v63, 0.0
    %v92 = vmax.f32 %v64, 0.0
    %v93 = vmul.f32 %v63, %v65
    %v94 = vmul.f32 %v64, %v66
    %v95 = vsub.f32 %v91, %v93
    %v96 = vsub.f32 %v92, %v94
    %v97 = vlog2.pop %v75
    %v98 = vmul.f32 %v97, 0.6931472
    %v99 = vlog2.pop %v76
    %v100 = vmul.f32 %v99, 0.6931472
    %v101 = vadd.f32 %v95, %v98
    %v102 = vadd.f32 %v96, %v100
    %v103 = vmul.f32 %v89, %v65
    %v104 = vmul.f32 %v90, %v66
    %v105 = vsub.f32 1.0, %v89
    %v106 = vsub.f32 1.0, %v90
    %v107 = vsub.f32 1.0, %v65
    %v108 = vsub.f32 1.0, %v66
    %v109 = vmul.f32 %v105, %v107
    %v110 = vmul.f32 %v106, %v108
    %v111 = vadd.f32 %v103, %v109
    %v112 = vadd.f32 %v104, %v110
    %v113 = vsub.f32 1.0, %v111
    %v114 = vsub.f32 1.0, %v112
    %v115 = vadd.f32 %v113, 1e-07
    %v116 = vadd.f32 %v114, 1e-07
    %v117 = vmul.f32 %v115, %v115
    %v118 = vmul.f32 %v116, %v116
    %v119 = vmul.f32 %v117, %v101
    %v120 = vmul.f32 %v118, %v102
    %v121 = vld [vmem:[#allocation7] sm:$0xff]
    %v122 = vadd.f32 %v65, %v66
    %v123 = vadd.f32 %v121, %v122
    %124 = vst [vmem:[#allocation7] sm:$0xff] %v123
    %v125 = vld [vmem:[#allocation8] sm:$0xff]
    %v126 = vmul.f32 %v65, %v119
    %v127 = vmul.f32 %v66, %v120
    %v128 = vadd.f32 %v126, %v127
    %v129 = vadd.f32 %v125, %v128
    %130 = vst [vmem:[#allocation8] sm:$0xff] %v129
    %v131 = vld [vmem:[#allocation10] sm:$0xff]
    %v132 = vadd.f32 %v119, %v120
    %v133 = vadd.f32 %v131, %v132
    %134 = vst [vmem:[#allocation10] sm:$0xff] %v133
    // Predicated region
    $region22: #{tpu_custom_call.1} parent=1 // pred_check
      _
    $region23: #{tpu_custom_call.1} parent=1 // pred_check_branch
      %136 = sbr.rel (0) target = $region25
    $region24: #{tpu_custom_call.1} parent=1 // pred_region
      %s138 = ssub.s32 128, 128
      %139 = vsyncadd [#allocation4], %s138
      %s141 = sshll.u32 [#allocation7], 4
      %s142 = int_to_ptr.vmem [resolvable:$true] %s141
      %144 = dma.vmem_to_hbm [thread:$0]  %s142, 128, %s2, [#allocation4]
    $region25: #{tpu_custom_call.1} parent=1 // pred_fallthru
      _
    // Predicated region
    $region26: #{tpu_custom_call.1} parent=1 // pred_check
      _
    $region27: #{tpu_custom_call.1} parent=1 // pred_check_branch
      %146 = sbr.rel (0) target = $region29
    $region28: #{tpu_custom_call.1} parent=1 // pred_region
      %s148 = ssub.s32 128, 128
      %149 = vsyncadd [#allocation9], %s148
      %s151 = sshll.u32 [#allocation8], 4
      %s152 = int_to_ptr.vmem [resolvable:$true] %s151
      %154 = dma.vmem_to_hbm [thread:$0]  %s152, 128, %s3, [#allocation9]
    $region29: #{tpu_custom_call.1} parent=1 // pred_fallthru
      _
    // Predicated region
    $region30: #{tpu_custom_call.1} parent=1 // pred_check
      _
    $region31: #{tpu_custom_call.1} parent=1 // pred_check_branch
      %156 = sbr.rel (0) target = $region33
    $region32: #{tpu_custom_call.1} parent=1 // pred_region
      %s158 = ssub.s32 128, 128
      %159 = vsyncadd [#allocation9], %s158
      %s161 = sshll.u32 [#allocation10], 4
      %s162 = int_to_ptr.vmem [resolvable:$true] %s161
      %164 = dma.vmem_to_hbm [thread:$0]  %s162, 128, %s4, [#allocation9]
    $region33: #{tpu_custom_call.1} parent=1 // pred_fallthru
      _
    // Predicated region
    $region34: #{tpu_custom_call.1} parent=1 // pred_check
      _
    $region35: #{tpu_custom_call.1} parent=1 // pred_check_branch
      %166 = sbr.rel (0) target = $region37
    $region36: #{tpu_custom_call.1} parent=1 // pred_region
      %167 = dma.done [#allocation4], 128
    $region37: #{tpu_custom_call.1} parent=1 // pred_fallthru
      _
    // Predicated region
    $region38: #{tpu_custom_call.1} parent=1 // pred_check
      _
    $region39: #{tpu_custom_call.1} parent=1 // pred_check_branch
      %169 = sbr.rel (0) target = $region41
    $region40: #{tpu_custom_call.1} parent=1 // pred_region
      %170 = dma.done [#allocation9], 128
    $region41: #{tpu_custom_call.1} parent=1 // pred_fallthru
      _
    // Predicated region
    $region42: #{tpu_custom_call.1} parent=1 // pred_check
      _
    $region43: #{tpu_custom_call.1} parent=1 // pred_check_branch
      %172 = sbr.rel (0) target = $region45
    $region44: #{tpu_custom_call.1} parent=1 // pred_region
      %173 = dma.done [#allocation9], 128
    $region45: #{tpu_custom_call.1} parent=1 // pred_fallthru
      _
    %174 = vsyncpa [#allocation3], 1
    %175 = vsyncpa [#allocation6], 1
    %176 = vsyncpa [#allocation4], 1
    %177 = vsyncpa [#allocation9], 1

</llo_original>
